<compile_context>
chip_gen: v6e
topology: v6e:2x2x1
jax: 0.10.0
libtpu: 0.0.40
codegen_flags: <defaults>
</compile_context>

<pallas_src>
import functools

import jax
import jax.numpy as jnp
import numpy as np
from jax.experimental import pallas as pl
from jax.experimental.pallas import tpu as pltpu

LEAKY_SLOPE = 0.01   # nn.LeakyReLU default
BN_EPS = 1e-5        # nn.BatchNorm1d default
LANES = 128          # TPU lane width; all feature axes are padded to this


def par_generator_kernel(x_ref, p_ref, o_ref):
    """x_ref: (B, 128) f32, lanes >= latent_dim are zero.
    p_ref: (4*128 + 8, 128) f32 packed parameter slab:
        rows [  0,128) : W1  (data in rows [0,in1), lanes [0,h0), rest zero)
        rows [128,256) : W2
        rows [256,384) : W3
        rows [384,512) : W4  (no bias; lanes [0,par_dim))
        rows [512,520) : row 512 = b1, 513 = b2, 514 = b3
    o_ref: (B, 128) f32; real output lives in lanes [0, par_dim).
    Zero padding propagates exactly: zero lanes stay zero through LeakyReLU
    and BatchNorm ((0-0)*rsqrt(0+eps) == 0), so padded columns never
    contaminate real ones."""
    inv_b = 1.0 / x_ref.shape[0]

    def act_bn(h):
        # LeakyReLU
        h = jnp.where(h > 0, h, LEAKY_SLOPE * h)
        # Single-pass training-mode BatchNorm1d (gamma=1, beta=0, biased var).
        s = jnp.sum(h, axis=0, keepdims=True)
        ss = jnp.sum(h * h, axis=0, keepdims=True)
        mean = s * inv_b
        var = ss * inv_b - mean * mean
        return (h - mean) * jax.lax.rsqrt(var + BN_EPS)

    biases = p_ref[4 * LANES:4 * LANES + 8, :]          # (8, 128)

    h = x_ref[...]
    # linear1 -> LeakyReLU -> BN1
    h = jnp.dot(h, p_ref[0 * LANES:1 * LANES, :],
                preferred_element_type=jnp.float32) + biases[0:1, :]
    h = act_bn(h)
    # linear2 -> LeakyReLU -> BN2
    h = jnp.dot(h, p_ref[1 * LANES:2 * LANES, :],
                preferred_element_type=jnp.float32) + biases[1:2, :]
    h = act_bn(h)
    # linear3 -> LeakyReLU -> BN3
    h = jnp.dot(h, p_ref[2 * LANES:3 * LANES, :],
                preferred_element_type=jnp.float32) + biases[2:3, :]
    h = act_bn(h)
    # linear4 (no bias)
    o_ref[...] = jnp.dot(h, p_ref[3 * LANES:4 * LANES, :],
                         preferred_element_type=jnp.float32)


@functools.partial(jax.jit, static_argnames=("par_dim",))
def par_generator(x, packed, *, par_dim):
    """x: (B, latent_dim) f32. packed: (4*128+8, 128) f32 parameter slab."""
    B, latent_dim = x.shape
    x_pad = jnp.pad(x.astype(jnp.float32), ((0, 0), (0, LANES - latent_dim)))
    vmem = pl.BlockSpec(memory_space=pltpu.MemorySpace.VMEM)
    out = pl.pallas_call(
        par_generator_kernel,
        out_shape=jax.ShapeDtypeStruct((B, LANES), jnp.float32),
        in_specs=[vmem, vmem],
        out_specs=vmem,
        # TODO(synk): if B ever scales to many thousands of rows, add
        # vmem_limit_bytes + a batch-tiled two-pass BatchNorm (v7x VMEM cliff).
    )(x_pad, packed)
    return out[:, :par_dim]


def pack_params(params):
    """Pack w1,b1,w2,b2,w3,b3,w4 into one lane-padded (4*128+8, 128) slab."""
    slab = np.zeros((4 * LANES + 8, LANES), dtype=np.float32)
    for i, name in enumerate(("w1", "w2", "w3", "w4")):
        w = np.asarray(params[name], dtype=np.float32)        # (in, out)
        assert w.shape[0] <= LANES and w.shape[1] <= LANES
        slab[i * LANES:i * LANES + w.shape[0], :w.shape[1]] = w
    for i, name in enumerate(("b1", "b2", "b3")):
        b = np.asarray(params[name], dtype=np.float32).reshape(-1)
        slab[4 * LANES + i, :b.shape[0]] = b
    return jnp.asarray(slab)


def xavier_normal(key, shape_out_in):
    # PyTorch xavier_normal_ on weight of shape (out, in); we store (in, out).
    fan_out, fan_in = shape_out_in
    std = float(np.sqrt(2.0 / (fan_in + fan_out)))
    w_oi = std * jax.random.normal(key, (fan_out, fan_in), dtype=jnp.float32)
    return w_oi.T  # (in, out)


def make_params(key, latent_dim, hidden, par_dim):
    k = jax.random.split(key, 8)
    return {
        "w1": xavier_normal(k[0], (hidden[0], latent_dim)),
        "b1": 0.1 * jax.random.normal(k[1], (1, hidden[0]), dtype=jnp.float32),
        "w2": xavier_normal(k[2], (hidden[1], hidden[0])),
        "b2": 0.1 * jax.random.normal(k[3], (1, hidden[1]), dtype=jnp.float32),
        "w3": xavier_normal(k[4], (hidden[2], hidden[1])),
        "b3": 0.1 * jax.random.normal(k[5], (1, hidden[2]), dtype=jnp.float32),
        "w4": xavier_normal(k[6], (par_dim, hidden[2])),  # bias=False
    }


def _ref_bn(h):
    mean = jnp.mean(h, axis=0, keepdims=True)
    var = jnp.mean((h - mean) * (h - mean), axis=0, keepdims=True)
    return (h - mean) * jax.lax.rsqrt(var + BN_EPS)


def reference(x, p):
    lrelu = lambda h: jnp.where(h > 0, h, LEAKY_SLOPE * h)
    h = jnp.dot(x, p["w1"]) + p["b1"]
    h = _ref_bn(lrelu(h))
    h = jnp.dot(h, p["w2"]) + p["b2"]
    h = _ref_bn(lrelu(h))
    h = jnp.dot(h, p["w3"]) + p["b3"]
    h = _ref_bn(lrelu(h))
    return jnp.dot(h, p["w4"])


if __name__ == "__main__":
    # NOTE: the PyTorch default par_hidden_neurons=[8, 8] is inconsistent with
    # the module body (linear3 indexes [2]); use a 3-entry hidden list as implied.
    batch = 8
    par_latent_dim = 4
    par_hidden_neurons = [32, 32, 32]
    par_dim = 4

    key = jax.random.PRNGKey(0)
    kx, kp = jax.random.split(key)
    x = jax.random.normal(kx, (batch, par_latent_dim), dtype=jnp.float32)
    params = make_params(kp, par_latent_dim, par_hidden_neurons, par_dim)
    packed = pack_params(params)

    out = par_generator(x, packed, par_dim=par_dim)
    out = jax.block_until_ready(out)

    ref = reference(x, params)
    np.testing.assert_allclose(np.asarray(out), np.asarray(ref),
                               rtol=1e-4, atol=1e-5)
    print("KERNEL_OK")
</pallas_src>

<mosaic_0001>
module attributes {stable_mosaic.version = 11 : i64} {
  func.func @par_generator_kernel(%arg0: memref<8x128xf32, #tpu.memory_space<vmem>>, %arg1: memref<520x128xf32, #tpu.memory_space<vmem>>, %arg2: memref<8x128xf32, #tpu.memory_space<vmem>>) attributes {dimension_semantics = [], scalar_prefetch = 0 : i64, scratch_operands = 0 : i64, tpu.core_type = #tpu.core_type<tc>} {
    %c512 = arith.constant 512 : index
    %c0 = arith.constant 0 : index
    %0 = vector.load %arg1[%c512, %c0] : memref<520x128xf32, #tpu.memory_space<vmem>>, vector<8x128xf32>
    %c0_0 = arith.constant 0 : index
    %c0_1 = arith.constant 0 : index
    %1 = vector.load %arg0[%c0_0, %c0_1] : memref<8x128xf32, #tpu.memory_space<vmem>>, vector<8x128xf32>
    %c0_2 = arith.constant 0 : index
    %c0_3 = arith.constant 0 : index
    %2 = vector.load %arg1[%c0_2, %c0_3] : memref<520x128xf32, #tpu.memory_space<vmem>>, vector<128x128xf32>
    %cst = arith.constant dense<0.000000e+00> : vector<8x128xf32>
    %3 = tpu.matmul %1, %2, %cst {dimension_numbers = #tpu.dot_dimension_numbers<[1], [0], [0], [1], [0, 0, 1, 1], [], []>} : vector<8x128xf32>, vector<128x128xf32>, vector<8x128xf32> -> vector<8x128xf32>
    %4 = vector.extract_strided_slice %0 {offsets = [0, 0], sizes = [1, 128], strides = [1, 1]} : vector<8x128xf32> to vector<1x128xf32>
    %5 = vector.broadcast %4 : vector<1x128xf32> to vector<8x128xf32>
    %6 = arith.addf %3, %5 : vector<8x128xf32>
    %cst_4 = arith.constant 0.000000e+00 : f32
    %7 = vector.broadcast %cst_4 : f32 to vector<8x128xf32>
    %8 = arith.cmpf ogt, %6, %7 : vector<8x128xf32>
    %cst_5 = arith.constant 0.00999999977 : f32
    %9 = vector.broadcast %cst_5 : f32 to vector<8x128xf32>
    %10 = arith.mulf %9, %6 : vector<8x128xf32>
    %11 = arith.select %8, %6, %10 : vector<8x128xi1>, vector<8x128xf32>
    %cst_6 = arith.constant dense<0.000000e+00> : vector<128xf32>
    %12 = vector.multi_reduction <add>, %11, %cst_6 [0] : vector<8x128xf32> to vector<128xf32>
    %13 = vector.shape_cast %12 : vector<128xf32> to vector<1x128xf32>
    %14 = arith.mulf %11, %11 : vector<8x128xf32>
    %cst_7 = arith.constant dense<0.000000e+00> : vector<128xf32>
    %15 = vector.multi_reduction <add>, %14, %cst_7 [0] : vector<8x128xf32> to vector<128xf32>
    %16 = vector.shape_cast %15 : vector<128xf32> to vector<1x128xf32>
    %cst_8 = arith.constant 1.250000e-01 : f32
    %17 = vector.broadcast %cst_8 : f32 to vector<1x128xf32>
    %18 = arith.mulf %13, %17 : vector<1x128xf32>
    %cst_9 = arith.constant 1.250000e-01 : f32
    %19 = vector.broadcast %cst_9 : f32 to vector<1x128xf32>
    %20 = arith.mulf %16, %19 : vector<1x128xf32>
    %21 = arith.mulf %18, %18 : vector<1x128xf32>
    %22 = arith.subf %20, %21 : vector<1x128xf32>
    %23 = vector.broadcast %18 : vector<1x128xf32> to vector<8x128xf32>
    %24 = arith.subf %11, %23 : vector<8x128xf32>
    %cst_10 = arith.constant 9.99999974E-6 : f32
    %25 = vector.broadcast %cst_10 : f32 to vector<1x128xf32>
    %26 = arith.addf %22, %25 : vector<1x128xf32>
    %27 = math.rsqrt %26 : vector<1x128xf32>
    %28 = vector.broadcast %27 : vector<1x128xf32> to vector<8x128xf32>
    %29 = arith.mulf %24, %28 : vector<8x128xf32>
    %c128 = arith.constant 128 : index
    %c0_11 = arith.constant 0 : index
    %30 = vector.load %arg1[%c128, %c0_11] : memref<520x128xf32, #tpu.memory_space<vmem>>, vector<128x128xf32>
    %cst_12 = arith.constant dense<0.000000e+00> : vector<8x128xf32>
    %31 = tpu.matmul %29, %30, %cst_12 {dimension_numbers = #tpu.dot_dimension_numbers<[1], [0], [0], [1], [0, 0, 1, 1], [], []>} : vector<8x128xf32>, vector<128x128xf32>, vector<8x128xf32> -> vector<8x128xf32>
    %32 = vector.extract_strided_slice %0 {offsets = [1, 0], sizes = [1, 128], strides = [1, 1]} : vector<8x128xf32> to vector<1x128xf32>
    %33 = vector.broadcast %32 : vector<1x128xf32> to vector<8x128xf32>
    %34 = arith.addf %31, %33 : vector<8x128xf32>
    %cst_13 = arith.constant 0.000000e+00 : f32
    %35 = vector.broadcast %cst_13 : f32 to vector<8x128xf32>
    %36 = arith.cmpf ogt, %34, %35 : vector<8x128xf32>
    %cst_14 = arith.constant 0.00999999977 : f32
    %37 = vector.broadcast %cst_14 : f32 to vector<8x128xf32>
    %38 = arith.mulf %37, %34 : vector<8x128xf32>
    %39 = arith.select %36, %34, %38 : vector<8x128xi1>, vector<8x128xf32>
    %cst_15 = arith.constant dense<0.000000e+00> : vector<128xf32>
    %40 = vector.multi_reduction <add>, %39, %cst_15 [0] : vector<8x128xf32> to vector<128xf32>
    %41 = vector.shape_cast %40 : vector<128xf32> to vector<1x128xf32>
    %42 = arith.mulf %39, %39 : vector<8x128xf32>
    %cst_16 = arith.constant dense<0.000000e+00> : vector<128xf32>
    %43 = vector.multi_reduction <add>, %42, %cst_16 [0] : vector<8x128xf32> to vector<128xf32>
    %44 = vector.shape_cast %43 : vector<128xf32> to vector<1x128xf32>
    %cst_17 = arith.constant 1.250000e-01 : f32
    %45 = vector.broadcast %cst_17 : f32 to vector<1x128xf32>
    %46 = arith.mulf %41, %45 : vector<1x128xf32>
    %cst_18 = arith.constant 1.250000e-01 : f32
    %47 = vector.broadcast %cst_18 : f32 to vector<1x128xf32>
    %48 = arith.mulf %44, %47 : vector<1x128xf32>
    %49 = arith.mulf %46, %46 : vector<1x128xf32>
    %50 = arith.subf %48, %49 : vector<1x128xf32>
    %51 = vector.broadcast %46 : vector<1x128xf32> to vector<8x128xf32>
    %52 = arith.subf %39, %51 : vector<8x128xf32>
    %cst_19 = arith.constant 9.99999974E-6 : f32
    %53 = vector.broadcast %cst_19 : f32 to vector<1x128xf32>
    %54 = arith.addf %50, %53 : vector<1x128xf32>
    %55 = math.rsqrt %54 : vector<1x128xf32>
    %56 = vector.broadcast %55 : vector<1x128xf32> to vector<8x128xf32>
    %57 = arith.mulf %52, %56 : vector<8x128xf32>
    %c256 = arith.constant 256 : index
    %c0_20 = arith.constant 0 : index
    %58 = vector.load %arg1[%c256, %c0_20] : memref<520x128xf32, #tpu.memory_space<vmem>>, vector<128x128xf32>
    %cst_21 = arith.constant dense<0.000000e+00> : vector<8x128xf32>
    %59 = tpu.matmul %57, %58, %cst_21 {dimension_numbers = #tpu.dot_dimension_numbers<[1], [0], [0], [1], [0, 0, 1, 1], [], []>} : vector<8x128xf32>, vector<128x128xf32>, vector<8x128xf32> -> vector<8x128xf32>
    %60 = vector.extract_strided_slice %0 {offsets = [2, 0], sizes = [1, 128], strides = [1, 1]} : vector<8x128xf32> to vector<1x128xf32>
    %61 = vector.broadcast %60 : vector<1x128xf32> to vector<8x128xf32>
    %62 = arith.addf %59, %61 : vector<8x128xf32>
    %cst_22 = arith.constant 0.000000e+00 : f32
    %63 = vector.broadcast %cst_22 : f32 to vector<8x128xf32>
    %64 = arith.cmpf ogt, %62, %63 : vector<8x128xf32>
    %cst_23 = arith.constant 0.00999999977 : f32
    %65 = vector.broadcast %cst_23 : f32 to vector<8x128xf32>
    %66 = arith.mulf %65, %62 : vector<8x128xf32>
    %67 = arith.select %64, %62, %66 : vector<8x128xi1>, vector<8x128xf32>
    %cst_24 = arith.constant dense<0.000000e+00> : vector<128xf32>
    %68 = vector.multi_reduction <add>, %67, %cst_24 [0] : vector<8x128xf32> to vector<128xf32>
    %69 = vector.shape_cast %68 : vector<128xf32> to vector<1x128xf32>
    %70 = arith.mulf %67, %67 : vector<8x128xf32>
    %cst_25 = arith.constant dense<0.000000e+00> : vector<128xf32>
    %71 = vector.multi_reduction <add>, %70, %cst_25 [0] : vector<8x128xf32> to vector<128xf32>
    %72 = vector.shape_cast %71 : vector<128xf32> to vector<1x128xf32>
    %cst_26 = arith.constant 1.250000e-01 : f32
    %73 = vector.broadcast %cst_26 : f32 to vector<1x128xf32>
    %74 = arith.mulf %69, %73 : vector<1x128xf32>
    %cst_27 = arith.constant 1.250000e-01 : f32
    %75 = vector.broadcast %cst_27 : f32 to vector<1x128xf32>
    %76 = arith.mulf %72, %75 : vector<1x128xf32>
    %77 = arith.mulf %74, %74 : vector<1x128xf32>
    %78 = arith.subf %76, %77 : vector<1x128xf32>
    %79 = vector.broadcast %74 : vector<1x128xf32> to vector<8x128xf32>
    %80 = arith.subf %67, %79 : vector<8x128xf32>
    %cst_28 = arith.constant 9.99999974E-6 : f32
    %81 = vector.broadcast %cst_28 : f32 to vector<1x128xf32>
    %82 = arith.addf %78, %81 : vector<1x128xf32>
    %83 = math.rsqrt %82 : vector<1x128xf32>
    %84 = vector.broadcast %83 : vector<1x128xf32> to vector<8x128xf32>
    %85 = arith.mulf %80, %84 : vector<8x128xf32>
    %c384 = arith.constant 384 : index
    %c0_29 = arith.constant 0 : index
    %86 = vector.load %arg1[%c384, %c0_29] : memref<520x128xf32, #tpu.memory_space<vmem>>, vector<128x128xf32>
    %cst_30 = arith.constant dense<0.000000e+00> : vector<8x128xf32>
    %87 = tpu.matmul %85, %86, %cst_30 {dimension_numbers = #tpu.dot_dimension_numbers<[1], [0], [0], [1], [0, 0, 1, 1], [], []>} : vector<8x128xf32>, vector<128x128xf32>, vector<8x128xf32> -> vector<8x128xf32>
    %c0_31 = arith.constant 0 : index
    %c0_32 = arith.constant 0 : index
    %88 = vector.load %arg2[%c0_31, %c0_32] : memref<8x128xf32, #tpu.memory_space<vmem>>, vector<8x128xf32>
    tpu.vector_store %arg2[%c0_31, %c0_32], %87 {strides = array<i32>} : memref<8x128xf32, #tpu.memory_space<vmem>>, vector<8x128xf32>,
    return
  }
}

</mosaic_0001>

<llo_original>
// kernel: par_generator.1
$region0: #{par_generator.1}
  #allocation0 [shape = 'u32[]', space=smem, size = 0x4, offset = 0x4, fixed_abs, tag = 'smem constant byte address 0x4 - core index']
  #allocation1 [shape = 'u32[144,128]{1,0:T(1,128)}', space=vmem, size = 0x12000, scoped, tag = 'internal scratch']
  %s0 = inlined_call_operand.vmem [shape: f32[8,128], index: 0, kind: input, shape index: {}]
  %s1 = inlined_call_operand.hbm [shape: f32[520,128], index: 1, kind: input, shape index: {}]
  %s2 = inlined_call_operand.vmem [shape: f32[8,128], index: 2, kind: output, shape index: {}]
  %s3 = sld [smem:[#allocation0]]
  $region22: #{par_generator.1} parent=0
    _
  %s5 = ssub.s32 1, %s3
  %s6 = scalar_select 0, %s5, %s3
  $region1: #{par_generator.1} parent=0
    #allocation2 [shape = 'u8[266240]{0}', space=vmem, size = 0x41000, scoped, tag = 'input window, operand 1, single buffered']
    #allocation3 [shape = 's32[1]{0}', space=sflag, size = 0x4, scoped, tag = 'scoped memory for par_generator.1']
    %7 = vsyncpa [#allocation3], 0
    // Predicated region
    $region2: #{par_generator.1} parent=1 // pred_check
      _
    $region3: #{par_generator.1} parent=1 // pred_check_branch
      %9 = sbr.rel (0) target = $region5
    $region4: #{par_generator.1} parent=1 // pred_region
      _
    $region5: #{par_generator.1} parent=1 // pred_fallthru
      _
    // Predicated region
    $region6: #{par_generator.1} parent=1 // pred_check
      _
    $region7: #{par_generator.1} parent=1 // pred_check_branch
      %11 = sbr.rel (0) target = $region9
    $region8: #{par_generator.1} parent=1 // pred_region
      %s13 = ssub.s32 8320, 8320
      %14 = vsyncadd [#allocation3], %s13
      %s15 = sshll.u32 [#allocation2], 4
      %s16 = int_to_ptr.vmem [resolvable:$true] %s15
      %21 = dma.hbm_to_vmem [thread:$0]  %s1, 8320, %s16, [#allocation3], 128, 128, 8
    $region9: #{par_generator.1} parent=1 // pred_fallthru
      _
    // Predicated region
    $region10: #{par_generator.1} parent=1 // pred_check
      _
    $region11: #{par_generator.1} parent=1 // pred_check_branch
      %23 = sbr.rel (0) target = $region13
    $region12: #{par_generator.1} parent=1 // pred_region
      %24 = dma.done [#allocation3], 8320
    $region13: #{par_generator.1} parent=1 // pred_fallthru
      _
    %v25 = vld [vmem:[#allocation2 + $0x200] sm:$0xff]
    %v26 = vld [vmem:[%s0] sm:$0xff]
    %v27 = vld [vmem:[#allocation2] sm:$0xff]
    %v28 = vld [vmem:[#allocation2 + $0x8] sm:$0xff]
    %v29 = vld [vmem:[#allocation2 + $0x10] sm:$0xff]
    %v30 = vld [vmem:[#allocation2 + $0x18] sm:$0xff]
    %v31 = vld [vmem:[#allocation2 + $0x20] sm:$0xff]
    %v32 = vld [vmem:[#allocation2 + $0x28] sm:$0xff]
    %v33 = vld [vmem:[#allocation2 + $0x30] sm:$0xff]
    %v34 = vld [vmem:[#allocation2 + $0x38] sm:$0xff]
    %v35 = vld [vmem:[#allocation2 + $0x40] sm:$0xff]
    %v36 = vld [vmem:[#allocation2 + $0x48] sm:$0xff]
    %v37 = vld [vmem:[#allocation2 + $0x50] sm:$0xff]
    %v38 = vld [vmem:[#allocation2 + $0x58] sm:$0xff]
    %v39 = vld [vmem:[#allocation2 + $0x60] sm:$0xff]
    %v40 = vld [vmem:[#allocation2 + $0x68] sm:$0xff]
    %v41 = vld [vmem:[#allocation2 + $0x70] sm:$0xff]
    %v42 = vld [vmem:[#allocation2 + $0x78] sm:$0xff]
    %v43 = vlaneseq
    %v44 = vshrl.u32 %v43, 7
    %v45 = vsub.s32 0, %v44
    %v46 = vrot.slane %v25, %v45
    %47 = vmatprep.subr.mxu0 0.0
    %48 = vmatpush1.msra.mxu0 %v42
    %49 = vmatprep.subr.mxu0 0.0
    %50 = vmatpush1.msra.mxu0 %v41
    %51 = vmatprep.subr.mxu0 0.0
    %52 = vmatpush1.msra.mxu0 %v40
    %53 = vmatprep.subr.mxu0 0.0
    %54 = vmatpush1.msra.mxu0 %v39
    %55 = vmatprep.subr.mxu0 0.0
    %56 = vmatpush1.msra.mxu0 %v38
    %57 = vmatprep.subr.mxu0 0.0
    %58 = vmatpush1.msra.mxu0 %v37
    %59 = vmatprep.subr.mxu0 0.0
    %60 = vmatpush1.msra.mxu0 %v36
    %61 = vmatprep.subr.mxu0 0.0
    %62 = vmatpush1.msra.mxu0 %v35
    %63 = vmatprep.subr.mxu0 0.0
    %64 = vmatpush1.msra.mxu0 %v34
    %65 = vmatprep.subr.mxu0 0.0
    %66 = vmatpush1.msra.mxu0 %v33
    %67 = vmatprep.subr.mxu0 0.0
    %68 = vmatpush1.msra.mxu0 %v32
    %69 = vmatprep.subr.mxu0 0.0
    %70 = vmatpush1.msra.mxu0 %v31
    %71 = vmatprep.subr.mxu0 0.0
    %72 = vmatpush1.msra.mxu0 %v30
    %73 = vmatprep.subr.mxu0 0.0
    %74 = vmatpush1.msra.mxu0 %v29
    %75 = vmatprep.subr.mxu0 0.0
    %76 = vmatpush1.msra.mxu0 %v28
    %77 = vmatprep.subr.mxu0 0.0
    %78 = vmatpush1.msra.mxu0 %v27
    %79 = vmatprep.subr.mxu0 0.0
    %80 = vmatpush2.msra.mxu0 0.0
    %81 = vmatprep.subr.mxu0 0.0
    %82 = vmatpush2.msra.mxu0 0.0
    %83 = vmatprep.subr.mxu0 0.0
    %84 = vmatpush2.msra.mxu0 0.0
    %85 = vmatprep.subr.mxu0 0.0
    %86 = vmatpush2.msra.mxu0 0.0
    %87 = vmatprep.subr.mxu0 0.0
    %88 = vmatpush2.msra.mxu0 0.0
    %89 = vmatprep.subr.mxu0 0.0
    %90 = vmatpush2.msra.mxu0 0.0
    %91 = vmatprep.subr.mxu0 0.0
    %92 = vmatpush2.msra.mxu0 0.0
    %93 = vmatprep.subr.mxu0 0.0
    %94 = vmatpush2.msra.mxu0 0.0
    %95 = vmatprep.subr.mxu0 0.0
    %96 = vmatpush2.msra.mxu0 0.0
    %97 = vmatprep.subr.mxu0 0.0
    %98 = vmatpush2.msra.mxu0 0.0
    %99 = vmatprep.subr.mxu0 0.0
    %100 = vmatpush2.msra.mxu0 0.0
    %101 = vmatprep.subr.mxu0 0.0
    %102 = vmatpush2.msra.mxu0 0.0
    %103 = vmatprep.subr.mxu0 0.0
    %104 = vmatpush2.msra.mxu0 0.0
    %105 = vmatprep.subr.mxu0 0.0
    %106 = vmatpush2.msra.mxu0 0.0
    %107 = vmatprep.subr.mxu0 0.0
    %108 = vmatpush2.msra.mxu0 0.0
    %109 = vmatprep.subr.mxu0 0.0
    %110 = vmatpush2.msra.mxu0 0.0
    %111 = vmatprep.mubr.f32.mxu0 0.0
    %112 = vmatmul.mubr.f32.gmra.mxu0 %v26
    %v113 = vpop.f32.mrf.mxu0
    %v114 = vadd.f32 %v46, %v113
    %v115 = vpop.f32.mrf.mxu0
    %116 = vdwg.mxu0
    %vm117 = vcmp.gt.f32.partialorder %v114, 0.0
    %v118 = vmul.f32 %v114, 0.01
    %v119 = vsel %vm117, %v114, %v118
    %v120 = vrot.slane %v119, 4
    %v121 = vadd.f32 %v119, %v120
    %v122 = vrot.slane %v121, 2
    %v123 = vadd.f32 %v121, %v122
    %v124 = vrot.slane %v123, 1
    %v125 = vadd.f32 %v123, %v124
    %v126 = vmul.f32 %v119, %v119
    %v127 = vrot.slane %v126, 4
    %v128 = vadd.f32 %v126, %v127
    %v129 = vrot.slane %v128, 2
    %v130 = vadd.f32 %v128, %v129
    %v131 = vrot.slane %v130, 1
    %v132 = vadd.f32 %v130, %v131
    %v133 = vmul.f32 %v125, 0.125
    %v134 = vmul.f32 %v132, 0.125
    %v135 = vmul.f32 %v133, %v133
    %v136 = vsub.f32 %v134, %v135
    %v137 = vsub.f32 %v119, %v133
    %v138 = vadd.f32 %v136, 1e-05
    %v139 = vrsqrt.pop %v138
    %v140 = vmul.f32 %v137, %v139
    %v141 = vld [vmem:[#allocation2 + $0x80] sm:$0xff]
    %v142 = vld [vmem:[#allocation2 + $0x88] sm:$0xff]
    %v143 = vld [vmem:[#allocation2 + $0x90] sm:$0xff]
    %v144 = vld [vmem:[#allocation2 + $0x98] sm:$0xff]
    %v145 = vld [vmem:[#allocation2 + $0xa0] sm:$0xff]
    %v146 = vld [vmem:[#allocation2 + $0xa8] sm:$0xff]
    %v147 = vld [vmem:[#allocation2 + $0xb0] sm:$0xff]
    %v148 = vld [vmem:[#allocation2 + $0xb8] sm:$0xff]
    %v149 = vld [vmem:[#allocation2 + $0xc0] sm:$0xff]
    %v150 = vld [vmem:[#allocation2 + $0xc8] sm:$0xff]
    %v151 = vld [vmem:[#allocation2 + $0xd0] sm:$0xff]
    %v152 = vld [vmem:[#allocation2 + $0xd8] sm:$0xff]
    %v153 = vld [vmem:[#allocation2 + $0xe0] sm:$0xff]
    %v154 = vld [vmem:[#allocation2 + $0xe8] sm:$0xff]
    %v155 = vld [vmem:[#allocation2 + $0xf0] sm:$0xff]
    %v156 = vld [vmem:[#allocation2 + $0xf8] sm:$0xff]
    %v157 = vlaneseq
    %v158 = vshrl.u32 %v157, 7
    %v159 = vsub.s32 1, %v158
    %v160 = vrot.slane %v25, %v159
    %161 = vmatprep.subr.mxu0 0.0
    %162 = vmatpush1.msra.mxu0 %v156
    %163 = vmatprep.subr.mxu0 0.0
    %164 = vmatpush1.msra.mxu0 %v155
    %165 = vmatprep.subr.mxu0 0.0
    %166 = vmatpush1.msra.mxu0 %v154
    %167 = vmatprep.subr.mxu0 0.0
    %168 = vmatpush1.msra.mxu0 %v153
    %169 = vmatprep.subr.mxu0 0.0
    %170 = vmatpush1.msra.mxu0 %v152
    %171 = vmatprep.subr.mxu0 0.0
    %172 = vmatpush1.msra.mxu0 %v151
    %173 = vmatprep.subr.mxu0 0.0
    %174 = vmatpush1.msra.mxu0 %v150
    %175 = vmatprep.subr.mxu0 0.0
    %176 = vmatpush1.msra.mxu0 %v149
    %177 = vmatprep.subr.mxu0 0.0
    %178 = vmatpush1.msra.mxu0 %v148
    %179 = vmatprep.subr.mxu0 0.0
    %180 = vmatpush1.msra.mxu0 %v147
    %181 = vmatprep.subr.mxu0 0.0
    %182 = vmatpush1.msra.mxu0 %v146
    %183 = vmatprep.subr.mxu0 0.0
    %184 = vmatpush1.msra.mxu0 %v145
    %185 = vmatprep.subr.mxu0 0.0
    %186 = vmatpush1.msra.mxu0 %v144
    %187 = vmatprep.subr.mxu0 0.0
    %188 = vmatpush1.msra.mxu0 %v143
    %189 = vmatprep.subr.mxu0 0.0
    %190 = vmatpush1.msra.mxu0 %v142
    %191 = vmatprep.subr.mxu0 0.0
    %192 = vmatpush1.msra.mxu0 %v141
    %193 = vmatprep.subr.mxu0 0.0
    %194 = vmatpush2.msra.mxu0 0.0
    %195 = vmatprep.subr.mxu0 0.0
    %196 = vmatpush2.msra.mxu0 0.0
    %197 = vmatprep.subr.mxu0 0.0
    %198 = vmatpush2.msra.mxu0 0.0
    %199 = vmatprep.subr.mxu0 0.0
    %200 = vmatpush2.msra.mxu0 0.0
    %201 = vmatprep.subr.mxu0 0.0
    %202 = vmatpush2.msra.mxu0 0.0
    %203 = vmatprep.subr.mxu0 0.0
    %204 = vmatpush2.msra.mxu0 0.0
    %205 = vmatprep.subr.mxu0 0.0
    %206 = vmatpush2.msra.mxu0 0.0
    %207 = vmatprep.subr.mxu0 0.0
    %208 = vmatpush2.msra.mxu0 0.0
    %209 = vmatprep.subr.mxu0 0.0
    %210 = vmatpush2.msra.mxu0 0.0
    %211 = vmatprep.subr.mxu0 0.0
    %212 = vmatpush2.msra.mxu0 0.0
    %213 = vmatprep.subr.mxu0 0.0
    %214 = vmatpush2.msra.mxu0 0.0
    %215 = vmatprep.subr.mxu0 0.0
    %216 = vmatpush2.msra.mxu0 0.0
    %217 = vmatprep.subr.mxu0 0.0
    %218 = vmatpush2.msra.mxu0 0.0
    %219 = vmatprep.subr.mxu0 0.0
    %220 = vmatpush2.msra.mxu0 0.0
    %221 = vmatprep.subr.mxu0 0.0
    %222 = vmatpush2.msra.mxu0 0.0
    %223 = vmatprep.subr.mxu0 0.0
    %224 = vmatpush2.msra.mxu0 0.0
    %225 = vmatprep.mubr.f32.mxu0 0.0
    %226 = vmatmul.mubr.f32.gmra.mxu0 %v140
    %v227 = vpop.f32.mrf.mxu0
    %v228 = vadd.f32 %v160, %v227
    %v229 = vpop.f32.mrf.mxu0
    %230 = vdwg.mxu0
    %vm231 = vcmp.gt.f32.partialorder %v228, 0.0
    %v232 = vmul.f32 %v228, 0.01
    %v233 = vsel %vm231, %v228, %v232
    %v234 = vrot.slane %v233, 4
    %v235 = vadd.f32 %v233, %v234
    %v236 = vrot.slane %v235, 2
    %v237 = vadd.f32 %v235, %v236
    %v238 = vrot.slane %v237, 1
    %v239 = vadd.f32 %v237, %v238
    %v240 = vmul.f32 %v233, %v233
    %v241 = vrot.slane %v240, 4
    %v242 = vadd.f32 %v240, %v241
    %v243 = vrot.slane %v242, 2
    %v244 = vadd.f32 %v242, %v243
    %v245 = vrot.slane %v244, 1
    %v246 = vadd.f32 %v244, %v245
    %v247 = vmul.f32 %v239, 0.125
    %v248 = vmul.f32 %v246, 0.125
    %v249 = vmul.f32 %v247, %v247
    %v250 = vsub.f32 %v248, %v249
    %v251 = vsub.f32 %v233, %v247
    %v252 = vadd.f32 %v250, 1e-05
    %v253 = vrsqrt.pop %v252
    %v254 = vmul.f32 %v251, %v253
    %v255 = vld [vmem:[#allocation2 + $0x100] sm:$0xff]
    %v256 = vld [vmem:[#allocation2 + $0x108] sm:$0xff]
    %v257 = vld [vmem:[#allocation2 + $0x110] sm:$0xff]
    %v258 = vld [vmem:[#allocation2 + $0x118] sm:$0xff]
    %v259 = vld [vmem:[#allocation2 + $0x120] sm:$0xff]
    %v260 = vld [vmem:[#allocation2 + $0x128] sm:$0xff]
    %v261 = vld [vmem:[#allocation2 + $0x130] sm:$0xff]
    %v262 = vld [vmem:[#allocation2 + $0x138] sm:$0xff]
    %v263 = vld [vmem:[#allocation2 + $0x140] sm:$0xff]
    %v264 = vld [vmem:[#allocation2 + $0x148] sm:$0xff]
    %v265 = vld [vmem:[#allocation2 + $0x150] sm:$0xff]
    %v266 = vld [vmem:[#allocation2 + $0x158] sm:$0xff]
    %v267 = vld [vmem:[#allocation2 + $0x160] sm:$0xff]
    %v268 = vld [vmem:[#allocation2 + $0x168] sm:$0xff]
    %v269 = vld [vmem:[#allocation2 + $0x170] sm:$0xff]
    %v270 = vld [vmem:[#allocation2 + $0x178] sm:$0xff]
    %v271 = vlaneseq
    %v272 = vshrl.u32 %v271, 7
    %v273 = vsub.s32 2, %v272
    %v274 = vrot.slane %v25, %v273
    %275 = vmatprep.subr.mxu0 0.0
    %276 = vmatpush1.msra.mxu0 %v270
    %277 = vmatprep.subr.mxu0 0.0
    %278 = vmatpush1.msra.mxu0 %v269
    %279 = vmatprep.subr.mxu0 0.0
    %280 = vmatpush1.msra.mxu0 %v268
    %281 = vmatprep.subr.mxu0 0.0
    %282 = vmatpush1.msra.mxu0 %v267
    %283 = vmatprep.subr.mxu0 0.0
    %284 = vmatpush1.msra.mxu0 %v266
    %285 = vmatprep.subr.mxu0 0.0
    %286 = vmatpush1.msra.mxu0 %v265
    %287 = vmatprep.subr.mxu0 0.0
    %288 = vmatpush1.msra.mxu0 %v264
    %289 = vmatprep.subr.mxu0 0.0
    %290 = vmatpush1.msra.mxu0 %v263
    %291 = vmatprep.subr.mxu0 0.0
    %292 = vmatpush1.msra.mxu0 %v262
    %293 = vmatprep.subr.mxu0 0.0
    %294 = vmatpush1.msra.mxu0 %v261
    %295 = vmatprep.subr.mxu0 0.0
    %296 = vmatpush1.msra.mxu0 %v260
    %297 = vmatprep.subr.mxu0 0.0
    %298 = vmatpush1.msra.mxu0 %v259
    %299 = vmatprep.subr.mxu0 0.0
    %300 = vmatpush1.msra.mxu0 %v258
    %301 = vmatprep.subr.mxu0 0.0
    %302 = vmatpush1.msra.mxu0 %v257
    %303 = vmatprep.subr.mxu0 0.0
    %304 = vmatpush1.msra.mxu0 %v256
    %305 = vmatprep.subr.mxu0 0.0
    %306 = vmatpush1.msra.mxu0 %v255
    %307 = vmatprep.subr.mxu0 0.0
    %308 = vmatpush2.msra.mxu0 0.0
    %309 = vmatprep.subr.mxu0 0.0
    %310 = vmatpush2.msra.mxu0 0.0
    %311 = vmatprep.subr.mxu0 0.0
    %312 = vmatpush2.msra.mxu0 0.0
    %313 = vmatprep.subr.mxu0 0.0
    %314 = vmatpush2.msra.mxu0 0.0
    %315 = vmatprep.subr.mxu0 0.0
    %316 = vmatpush2.msra.mxu0 0.0
    %317 = vmatprep.subr.mxu0 0.0
    %318 = vmatpush2.msra.mxu0 0.0
    %319 = vmatprep.subr.mxu0 0.0
    %320 = vmatpush2.msra.mxu0 0.0
    %321 = vmatprep.subr.mxu0 0.0
    %322 = vmatpush2.msra.mxu0 0.0
    %323 = vmatprep.subr.mxu0 0.0
    %324 = vmatpush2.msra.mxu0 0.0
    %325 = vmatprep.subr.mxu0 0.0
    %326 = vmatpush2.msra.mxu0 0.0
    %327 = vmatprep.subr.mxu0 0.0
    %328 = vmatpush2.msra.mxu0 0.0
    %329 = vmatprep.subr.mxu0 0.0
    %330 = vmatpush2.msra.mxu0 0.0
    %331 = vmatprep.subr.mxu0 0.0
    %332 = vmatpush2.msra.mxu0 0.0
    %333 = vmatprep.subr.mxu0 0.0
    %334 = vmatpush2.msra.mxu0 0.0
    %335 = vmatprep.subr.mxu0 0.0
    %336 = vmatpush2.msra.mxu0 0.0
    %337 = vmatprep.subr.mxu0 0.0
    %338 = vmatpush2.msra.mxu0 0.0
    %339 = vmatprep.mubr.f32.mxu0 0.0
    %340 = vmatmul.mubr.f32.gmra.mxu0 %v254
    %v341 = vpop.f32.mrf.mxu0
    %v342 = vadd.f32 %v274, %v341
    %v343 = vpop.f32.mrf.mxu0
    %344 = vdwg.mxu0
    %vm345 = vcmp.gt.f32.partialorder %v342, 0.0
    %v346 = vmul.f32 %v342, 0.01
    %v347 = vsel %vm345, %v342, %v346
    %v348 = vrot.slane %v347, 4
    %v349 = vadd.f32 %v347, %v348
    %v350 = vrot.slane %v349, 2
    %v351 = vadd.f32 %v349, %v350
    %v352 = vrot.slane %v351, 1
    %v353 = vadd.f32 %v351, %v352
    %v354 = vmul.f32 %v347, %v347
    %v355 = vrot.slane %v354, 4
    %v356 = vadd.f32 %v354, %v355
    %v357 = vrot.slane %v356, 2
    %v358 = vadd.f32 %v356, %v357
    %v359 = vrot.slane %v358, 1
    %v360 = vadd.f32 %v358, %v359
    %v361 = vmul.f32 %v353, 0.125
    %v362 = vmul.f32 %v360, 0.125
    %v363 = vmul.f32 %v361, %v361
    %v364 = vsub.f32 %v362, %v363
    %v365 = vsub.f32 %v347, %v361
    %v366 = vadd.f32 %v364, 1e-05
    %v367 = vrsqrt.pop %v366
    %v368 = vmul.f32 %v365, %v367
    %v369 = vld [vmem:[#allocation2 + $0x180] sm:$0xff]
    %v370 = vld [vmem:[#allocation2 + $0x188] sm:$0xff]
    %v371 = vld [vmem:[#allocation2 + $0x190] sm:$0xff]
    %v372 = vld [vmem:[#allocation2 + $0x198] sm:$0xff]
    %v373 = vld [vmem:[#allocation2 + $0x1a0] sm:$0xff]
    %v374 = vld [vmem:[#allocation2 + $0x1a8] sm:$0xff]
    %v375 = vld [vmem:[#allocation2 + $0x1b0] sm:$0xff]
    %v376 = vld [vmem:[#allocation2 + $0x1b8] sm:$0xff]
    %v377 = vld [vmem:[#allocation2 + $0x1c0] sm:$0xff]
    %v378 = vld [vmem:[#allocation2 + $0x1c8] sm:$0xff]
    %v379 = vld [vmem:[#allocation2 + $0x1d0] sm:$0xff]
    %v380 = vld [vmem:[#allocation2 + $0x1d8] sm:$0xff]
    %v381 = vld [vmem:[#allocation2 + $0x1e0] sm:$0xff]
    %v382 = vld [vmem:[#allocation2 + $0x1e8] sm:$0xff]
    %v383 = vld [vmem:[#allocation2 + $0x1f0] sm:$0xff]
    %v384 = vld [vmem:[#allocation2 + $0x1f8] sm:$0xff]
    %385 = vmatprep.subr.mxu0 0.0
    %386 = vmatpush1.msra.mxu0 %v384
    %387 = vmatprep.subr.mxu0 0.0
    %388 = vmatpush1.msra.mxu0 %v383
    %389 = vmatprep.subr.mxu0 0.0
    %390 = vmatpush1.msra.mxu0 %v382
    %391 = vmatprep.subr.mxu0 0.0
    %392 = vmatpush1.msra.mxu0 %v381
    %393 = vmatprep.subr.mxu0 0.0
    %394 = vmatpush1.msra.mxu0 %v380
    %395 = vmatprep.subr.mxu0 0.0
    %396 = vmatpush1.msra.mxu0 %v379
    %397 = vmatprep.subr.mxu0 0.0
    %398 = vmatpush1.msra.mxu0 %v378
    %399 = vmatprep.subr.mxu0 0.0
    %400 = vmatpush1.msra.mxu0 %v377
    %401 = vmatprep.subr.mxu0 0.0
    %402 = vmatpush1.msra.mxu0 %v376
    %403 = vmatprep.subr.mxu0 0.0
    %404 = vmatpush1.msra.mxu0 %v375
    %405 = vmatprep.subr.mxu0 0.0
    %406 = vmatpush1.msra.mxu0 %v374
    %407 = vmatprep.subr.mxu0 0.0
    %408 = vmatpush1.msra.mxu0 %v373
    %409 = vmatprep.subr.mxu0 0.0
    %410 = vmatpush1.msra.mxu0 %v372
    %411 = vmatprep.subr.mxu0 0.0
    %412 = vmatpush1.msra.mxu0 %v371
    %413 = vmatprep.subr.mxu0 0.0
    %414 = vmatpush1.msra.mxu0 %v370
    %415 = vmatprep.subr.mxu0 0.0
    %416 = vmatpush1.msra.mxu0 %v369
    %417 = vmatprep.subr.mxu0 0.0
    %418 = vmatpush2.msra.mxu0 0.0
    %419 = vmatprep.subr.mxu0 0.0
    %420 = vmatpush2.msra.mxu0 0.0
    %421 = vmatprep.subr.mxu0 0.0
    %422 = vmatpush2.msra.mxu0 0.0
    %423 = vmatprep.subr.mxu0 0.0
    %424 = vmatpush2.msra.mxu0 0.0
    %425 = vmatprep.subr.mxu0 0.0
    %426 = vmatpush2.msra.mxu0 0.0
    %427 = vmatprep.subr.mxu0 0.0
    %428 = vmatpush2.msra.mxu0 0.0
    %429 = vmatprep.subr.mxu0 0.0
    %430 = vmatpush2.msra.mxu0 0.0
    %431 = vmatprep.subr.mxu0 0.0
    %432 = vmatpush2.msra.mxu0 0.0
    %433 = vmatprep.subr.mxu0 0.0
    %434 = vmatpush2.msra.mxu0 0.0
    %435 = vmatprep.subr.mxu0 0.0
    %436 = vmatpush2.msra.mxu0 0.0
    %437 = vmatprep.subr.mxu0 0.0
    %438 = vmatpush2.msra.mxu0 0.0
    %439 = vmatprep.subr.mxu0 0.0
    %440 = vmatpush2.msra.mxu0 0.0
    %441 = vmatprep.subr.mxu0 0.0
    %442 = vmatpush2.msra.mxu0 0.0
    %443 = vmatprep.subr.mxu0 0.0
    %444 = vmatpush2.msra.mxu0 0.0
    %445 = vmatprep.subr.mxu0 0.0
    %446 = vmatpush2.msra.mxu0 0.0
    %447 = vmatprep.subr.mxu0 0.0
    %448 = vmatpush2.msra.mxu0 0.0
    %449 = vmatprep.mubr.f32.mxu0 0.0
    %450 = vmatmul.mubr.f32.gmra.mxu0 %v368
    %v451 = vpop.f32.mrf.mxu0
    %v452 = vadd.f32 0.0, %v451
    %v453 = vpop.f32.mrf.mxu0
    %454 = vdwg.mxu0
    %455 = vst [vmem:[%s2] sm:$0xff] %v452
    // Predicated region
    $region14: #{par_generator.1} parent=1 // pred_check
      _
    $region15: #{par_generator.1} parent=1 // pred_check_branch
      %457 = sbr.rel (0) target = $region17
    $region16: #{par_generator.1} parent=1 // pred_region
      _
    $region17: #{par_generator.1} parent=1 // pred_fallthru
      _
    // Predicated region
    $region18: #{par_generator.1} parent=1 // pred_check
      _
    $region19: #{par_generator.1} parent=1 // pred_check_branch
      %459 = sbr.rel (0) target = $region21
    $region20: #{par_generator.1} parent=1 // pred_region
      _
    $region21: #{par_generator.1} parent=1 // pred_fallthru
      _
    %460 = vsyncpa [#allocation3], 1

</llo_original>
